<compile_context>
chip_gen: v7x
topology: tpu7x:2x2x1
jax: 0.10.0
libtpu: 0.0.40
codegen_flags: <defaults>
</compile_context>

<pallas_src>
import jax
import jax.numpy as jnp
from jax.experimental import pallas as pl
from jax.experimental.pallas import tpu as pltpu


def _same_padding(k):
    # Mirrors the PyTorch helper's SAME rule:
    #   pad_before = k // 2, pad_after = (k - 1) // 2
    return (k // 2, (k - 1) // 2)


def _round_up(x, m):
    return ((x + m - 1) // m) * m


def _sublane(dtype):
    # Second-minor tile granularity per dtype: f32 -> 8, bf16 -> 16, int8 -> 32.
    return max(8, 32 // jnp.dtype(dtype).itemsize)


def _vmem_capacity_bytes():
    try:
        info = pltpu.get_tpu_info()
        for name in ("vmem_capacity_bytes", "vmem_size_bytes", "vmem_bytes"):
            val = getattr(info, name, None)
            if val:
                return int(val)
    except Exception:
        pass
    return 64 << 20  # conservative floor: v7x has 64 MiB/TC (v5e/v6e: 128 MiB)


def _pick_rows_per_band(Ho, Wo, N, max_lanes=2048):
    """Output rows per grid step.

    Largest divisor TH of Ho whose dense band width TH*Wo is a multiple of 128
    (unmasked full-width output stores) and <= max_lanes; when batch == 1 try
    to keep >= 2 bands so both v7x TensorCores get work.  Fall back to the
    whole image (block == full array dim is always a legal BlockSpec).
    """
    divisors = [d for d in range(1, Ho + 1) if Ho % d == 0]
    cands = [d for d in divisors if (d * Wo) % 128 == 0 and d * Wo <= max_lanes]
    if not cands:
        return Ho
    if N == 1:
        split = [d for d in cands if Ho // d >= 2]
        if split:
            cands = split
    return max(cands)


def conv2d_pallas(x_nchw, kernel_oihw, bias=None, padding="SAME"):
    """Pallas equivalent of the reference `conv2d` (stride 1, zero pad, + bias)."""
    N, Cin, H, W = x_nchw.shape
    Cout, Cin_w, KH, KW = kernel_oihw.shape
    assert Cin == Cin_w, "channel mismatch"

    if padding == "SAME":
        ph, pw = _same_padding(KH), _same_padding(KW)
    elif padding == "VALID":
        ph, pw = (0, 0), (0, 0)
    else:
        raise ValueError(f"unknown padding {padding!r}")

    Hp, Wp = H + ph[0] + ph[1], W + pw[0] + pw[1]
    Ho, Wo = Hp - KH + 1, Wp - KW + 1
    assert Ho > 0 and Wo > 0, "kernel larger than (padded) input"

    dtype = jnp.dtype(x_nchw.dtype)
    itemsize = dtype.itemsize
    sub = _sublane(dtype)

    K = KH * KW * Cin
    K_p = _round_up(K, sub)         # contraction dim padded to sublane multiple
    Cout_p = _round_up(Cout, sub)   # Cout pads to sublanes only (NOT to 128)

    TH = _pick_rows_per_band(Ho, Wo, N)
    n_band = Ho // TH
    # GEMM is computed over Wp-strided rows ("wide" trick: each patch row is a
    # single contiguous lane view); Mg is sized so no view runs out of bounds.
    Mg = (TH - 1) * Wp + Wo
    pad_any = (ph != (0, 0)) or (pw != (0, 0))

    # ---- wrapper-side prep: free reshapes / tiny weight packing only ---------
    x_flat = x_nchw.reshape(N, Cin, H * W)            # contiguous merge -> free
    # tap order k = (ky*KW + kx)*Cin + ci, matching the in-kernel patch build.
    w_flat = jnp.transpose(kernel_oihw, (0, 2, 3, 1)).reshape(Cout, K)
    w_flat = jnp.pad(w_flat.astype(dtype), ((0, Cout_p - Cout), (0, K_p - K)))
    if bias is None:
        b_col = jnp.zeros((Cout_p, 1), jnp.float32)
    else:
        b_col = jnp.pad(bias.astype(jnp.float32),
                        (0, Cout_p - Cout)).reshape(Cout_p, 1)

    # ---- kernel ---------------------------------------------------------------
    def kernel(x_ref, w_ref, b_ref, o_ref, xpad_s):
        # x_ref : (1, Cin, H*W)      one image, dense contiguous DMA
        # w_ref : (Cout_p, K_p)      resident flattened filters
        # b_ref : (Cout_p, 1)        resident bias (f32)
        # o_ref : (1, Cout_p, TH*Wo) dense channel-major output band
        # xpad_s: (Cin, Hp*Wp)       VMEM scratch: zero-padded image plane

        # 1) Build the zero-padded plane in VMEM (fuses F.pad into the kernel).
        if pad_any:
            xpad_s[...] = jnp.zeros_like(xpad_s)
        xv = x_ref[0]                                    # (Cin, H*W)
        for h in range(H):
            dst = (ph[0] + h) * Wp + pw[0]
            xpad_s[:, dst:dst + W] = xv[:, h * W:(h + 1) * W]

        # 2) im2col rows = K lane-shifted views of the padded plane (VMEM only).
        if n_band == 1:
            base = 0
        else:
            base = pl.multiple_of(pl.program_id(1) * (TH * Wp), TH * Wp)
        taps = []
        for ky in range(KH):
            for kx in range(KW):
                taps.append(xpad_s[:, pl.ds(base + ky * Wp + kx, Mg)])
        if K_p > K:
            taps.append(jnp.zeros((K_p - K, Mg), dtype))
        patches = jnp.concatenate(taps, axis=0)          # (K_p, Mg)

        # 3) One MXU GEMM per band, native dtype in, f32 accumulation, + bias.
        acc = jnp.dot(w_ref[...], patches, preferred_element_type=jnp.float32)
        acc = acc + b_ref[...]                           # (Cout_p, 1) broadcast

        # 4) Compact Wp-strided rows -> dense Wo-strided rows inside VMEM so the
        #    HBM-side output block stays lane-dense (TH*Wo is a 128 multiple).
        if Wp == Wo:
            o_ref[0] = acc.astype(o_ref.dtype)
        else:
            for y in range(TH):
                o_ref[0, :, y * Wo:(y + 1) * Wo] = (
                    acc[:, y * Wp:y * Wp + Wo].astype(o_ref.dtype))

    # ---- device-derived VMEM budget (v7x: 64 MiB/TC vs 128 MiB on v5e/v6e) ----
    x_blk = Cin * H * W * itemsize
    o_blk = Cout_p * TH * Wo * itemsize
    w_blk = Cout_p * K_p * itemsize
    b_blk = Cout_p * 4
    scratch_b = Cin * Hp * Wp * itemsize
    live_vals = K_p * Mg * itemsize + Cout_p * Mg * 4    # patches + f32 acc
    need = 2 * (x_blk + o_blk) + w_blk + b_blk + scratch_b + live_vals
    budget = int(_vmem_capacity_bytes() * 0.6)
    if need > budget:
        # TODO(synk): halo-DMA row tiles + K grid axis with f32 accumulator for
        #             images / channel counts whose working set exceeds VMEM.
        raise NotImplementedError(
            f"conv2d_pallas working set {need} B exceeds VMEM budget {budget} B")
    vmem_limit = int(min(budget, max(16 << 20, 2 * need)))

    out = pl.pallas_call(
        kernel,
        out_shape=jax.ShapeDtypeStruct((N, Cout_p, Ho * Wo), dtype),
        grid=(N, n_band),
        in_specs=[
            # full image per batch element; the block index only changes with n,
            # so it is not re-fetched across the band axis.
            pl.BlockSpec((1, Cin, H * W), lambda n, r: (n, 0, 0)),
            # constant block index -> weights / bias resident for the whole grid.
            pl.BlockSpec((Cout_p, K_p), lambda n, r: (0, 0)),
            pl.BlockSpec((Cout_p, 1), lambda n, r: (0, 0)),
        ],
        out_specs=pl.BlockSpec((1, Cout_p, TH * Wo), lambda n, r: (n, 0, r)),
        scratch_shapes=[pltpu.VMEM((Cin, Hp * Wp), dtype)],
        compiler_params=pltpu.CompilerParams(
            dimension_semantics=("parallel", "parallel"),
            vmem_limit_bytes=vmem_limit,
        ),
    )(x_flat, w_flat, b_col)

    if Cout_p != Cout:
        out = out[:, :Cout, :]          # only when Cout is not sublane-aligned
    # Channel-major already: splitting the last dim into (Ho, Wo) is free.
    return out.reshape(N, Cout, Ho, Wo)


class Conv2dPallas:
    """Pallas port of the PyTorch Conv2d module (deterministic synthetic init)."""

    def __init__(self, in_channels, out_channels, kernel_size, use_bias=True,
                 padding="SAME", *, key):
        # nn.init.normal_(std=0.05) on (Cout, Cin, KH, KW); bias = zeros(Cout).
        self.kernel = 0.05 * jax.random.normal(
            key, (out_channels, in_channels, kernel_size[0], kernel_size[1]),
            dtype=jnp.float32)
        self.bias = jnp.zeros((out_channels,), jnp.float32)
        self.use_bias = use_bias
        self.padding = padding

    def __call__(self, x_nchw):
        # The reference forward only skips bias when use_bias is None (both
        # True and False add the bias); reproduce that behaviour exactly.
        b = None if self.use_bias is None else self.bias
        return conv2d_pallas(x_nchw, self.kernel, b, padding=self.padding)


if __name__ == "__main__":
    key = jax.random.PRNGKey(0)
    k_w, k_x = jax.random.split(key)

    N, Cin, H, W = 2, 4, 16, 16
    Cout, KH, KW = 8, 3, 3

    module = Conv2dPallas(Cin, Cout, (KH, KW), use_bias=True,
                          padding="SAME", key=k_w)
    x = jax.random.normal(k_x, (N, Cin, H, W), dtype=jnp.float32)

    out = jax.block_until_ready(module(x))

    # Plain-JAX reference (same SAME-padding rule as the PyTorch helper).
    ph, pw = _same_padding(KH), _same_padding(KW)
    ref = jax.lax.conv_general_dilated(
        x, module.kernel, window_strides=(1, 1), padding=[ph, pw],
        dimension_numbers=("NCHW", "OIHW", "NCHW"),
    ) + module.bias[None, :, None, None]

    assert out.shape == (N, Cout, H, W), out.shape
    assert jnp.allclose(out, ref, atol=1e-4, rtol=1e-4), (
        float(jnp.max(jnp.abs(out - ref))))
    print("KERNEL_OK")
</pallas_src>

<mosaic_0001>
module attributes {stable_mosaic.version = 11 : i64} {
  func.func @kernel(%arg0: i32, %arg1: i32, %arg2: memref<1x4x256xf32, #tpu.memory_space<vmem>>, %arg3: memref<8x40xf32, #tpu.memory_space<vmem>>, %arg4: memref<8x1xf32, #tpu.memory_space<vmem>>, %arg5: memref<1x8x256xf32, #tpu.memory_space<vmem>>, %arg6: memref<4x324xf32, #tpu.memory_space<vmem>>) attributes {dimension_semantics = [#tpu.dimension_semantics<parallel>, #tpu.dimension_semantics<parallel>], iteration_bounds = array<i64: 2, 1>, scalar_prefetch = 0 : i64, scratch_operands = 1 : i64, tpu.core_type = #tpu.core_type<tc>, window_params = [{transform_indices = @transform_0, window_bounds = array<i64: 1, 4, 256>}, {pipeline_mode = #tpu.pipeline_mode<synchronous>, transform_indices = @transform_1, window_bounds = array<i64: 8, 40>}, {pipeline_mode = #tpu.pipeline_mode<synchronous>, transform_indices = @transform_2, window_bounds = array<i64: 8, 1>}, {transform_indices = @transform_3, window_bounds = array<i64: 1, 8, 256>}]} {
    %cst = arith.constant 0.000000e+00 : f32
    %0 = vector.broadcast %cst : f32 to vector<4x324xf32>
    %c0 = arith.constant 0 : index
    %c0_0 = arith.constant 0 : index
    %1 = vector.load %arg6[%c0, %c0_0] : memref<4x324xf32, #tpu.memory_space<vmem>>, vector<4x324xf32>
    tpu.vector_store %arg6[%c0, %c0_0], %0 {strides = array<i32>} : memref<4x324xf32, #tpu.memory_space<vmem>>, vector<4x324xf32>,
    %c0_1 = arith.constant 0 : index
    %c0_2 = arith.constant 0 : index
    %c0_3 = arith.constant 0 : index
    %2 = vector.load %arg2[%c0_1, %c0_2, %c0_3] : memref<1x4x256xf32, #tpu.memory_space<vmem>>, vector<1x4x256xf32>
    %3 = vector.shape_cast %2 : vector<1x4x256xf32> to vector<4x256xf32>
    %4 = vector.extract_strided_slice %3 {offsets = [0, 0], sizes = [4, 16], strides = [1, 1]} : vector<4x256xf32> to vector<4x16xf32>
    %c0_4 = arith.constant 0 : index
    %c19 = arith.constant 19 : index
    %5 = vector.load %arg6[%c0_4, %c19] : memref<4x324xf32, #tpu.memory_space<vmem>>, vector<4x16xf32>
    tpu.vector_store %arg6[%c0_4, %c19], %4 {strides = array<i32>} : memref<4x324xf32, #tpu.memory_space<vmem>>, vector<4x16xf32>,
    %6 = vector.extract_strided_slice %3 {offsets = [0, 16], sizes = [4, 16], strides = [1, 1]} : vector<4x256xf32> to vector<4x16xf32>
    %c0_5 = arith.constant 0 : index
    %c37 = arith.constant 37 : index
    %7 = vector.load %arg6[%c0_5, %c37] : memref<4x324xf32, #tpu.memory_space<vmem>>, vector<4x16xf32>
    tpu.vector_store %arg6[%c0_5, %c37], %6 {strides = array<i32>} : memref<4x324xf32, #tpu.memory_space<vmem>>, vector<4x16xf32>,
    %8 = vector.extract_strided_slice %3 {offsets = [0, 32], sizes = [4, 16], strides = [1, 1]} : vector<4x256xf32> to vector<4x16xf32>
    %c0_6 = arith.constant 0 : index
    %c55 = arith.constant 55 : index
    %9 = vector.load %arg6[%c0_6, %c55] : memref<4x324xf32, #tpu.memory_space<vmem>>, vector<4x16xf32>
    tpu.vector_store %arg6[%c0_6, %c55], %8 {strides = array<i32>} : memref<4x324xf32, #tpu.memory_space<vmem>>, vector<4x16xf32>,
    %10 = vector.extract_strided_slice %3 {offsets = [0, 48], sizes = [4, 16], strides = [1, 1]} : vector<4x256xf32> to vector<4x16xf32>
    %c0_7 = arith.constant 0 : index
    %c73 = arith.constant 73 : index
    %11 = vector.load %arg6[%c0_7, %c73] : memref<4x324xf32, #tpu.memory_space<vmem>>, vector<4x16xf32>
    tpu.vector_store %arg6[%c0_7, %c73], %10 {strides = array<i32>} : memref<4x324xf32, #tpu.memory_space<vmem>>, vector<4x16xf32>,
    %12 = vector.extract_strided_slice %3 {offsets = [0, 64], sizes = [4, 16], strides = [1, 1]} : vector<4x256xf32> to vector<4x16xf32>
    %c0_8 = arith.constant 0 : index
    %c91 = arith.constant 91 : index
    %13 = vector.load %arg6[%c0_8, %c91] : memref<4x324xf32, #tpu.memory_space<vmem>>, vector<4x16xf32>
    tpu.vector_store %arg6[%c0_8, %c91], %12 {strides = array<i32>} : memref<4x324xf32, #tpu.memory_space<vmem>>, vector<4x16xf32>,
    %14 = vector.extract_strided_slice %3 {offsets = [0, 80], sizes = [4, 16], strides = [1, 1]} : vector<4x256xf32> to vector<4x16xf32>
    %c0_9 = arith.constant 0 : index
    %c109 = arith.constant 109 : index
    %15 = vector.load %arg6[%c0_9, %c109] : memref<4x324xf32, #tpu.memory_space<vmem>>, vector<4x16xf32>
    tpu.vector_store %arg6[%c0_9, %c109], %14 {strides = array<i32>} : memref<4x324xf32, #tpu.memory_space<vmem>>, vector<4x16xf32>,
    %16 = vector.extract_strided_slice %3 {offsets = [0, 96], sizes = [4, 16], strides = [1, 1]} : vector<4x256xf32> to vector<4x16xf32>
    %c0_10 = arith.constant 0 : index
    %c127 = arith.constant 127 : index
    %17 = vector.load %arg6[%c0_10, %c127] : memref<4x324xf32, #tpu.memory_space<vmem>>, vector<4x16xf32>
    tpu.vector_store %arg6[%c0_10, %c127], %16 {strides = array<i32>} : memref<4x324xf32, #tpu.memory_space<vmem>>, vector<4x16xf32>,
    %18 = vector.extract_strided_slice %3 {offsets = [0, 112], sizes = [4, 16], strides = [1, 1]} : vector<4x256xf32> to vector<4x16xf32>
    %c0_11 = arith.constant 0 : index
    %c145 = arith.constant 145 : index
    %19 = vector.load %arg6[%c0_11, %c145] : memref<4x324xf32, #tpu.memory_space<vmem>>, vector<4x16xf32>
    tpu.vector_store %arg6[%c0_11, %c145], %18 {strides = array<i32>} : memref<4x324xf32, #tpu.memory_space<vmem>>, vector<4x16xf32>,
    %20 = vector.extract_strided_slice %3 {offsets = [0, 128], sizes = [4, 16], strides = [1, 1]} : vector<4x256xf32> to vector<4x16xf32>
    %c0_12 = arith.constant 0 : index
    %c163 = arith.constant 163 : index
    %21 = vector.load %arg6[%c0_12, %c163] : memref<4x324xf32, #tpu.memory_space<vmem>>, vector<4x16xf32>
    tpu.vector_store %arg6[%c0_12, %c163], %20 {strides = array<i32>} : memref<4x324xf32, #tpu.memory_space<vmem>>, vector<4x16xf32>,
    %22 = vector.extract_strided_slice %3 {offsets = [0, 144], sizes = [4, 16], strides = [1, 1]} : vector<4x256xf32> to vector<4x16xf32>
    %c0_13 = arith.constant 0 : index
    %c181 = arith.constant 181 : index
    %23 = vector.load %arg6[%c0_13, %c181] : memref<4x324xf32, #tpu.memory_space<vmem>>, vector<4x16xf32>
    tpu.vector_store %arg6[%c0_13, %c181], %22 {strides = array<i32>} : memref<4x324xf32, #tpu.memory_space<vmem>>, vector<4x16xf32>,
    %24 = vector.extract_strided_slice %3 {offsets = [0, 160], sizes = [4, 16], strides = [1, 1]} : vector<4x256xf32> to vector<4x16xf32>
    %c0_14 = arith.constant 0 : index
    %c199 = arith.constant 199 : index
    %25 = vector.load %arg6[%c0_14, %c199] : memref<4x324xf32, #tpu.memory_space<vmem>>, vector<4x16xf32>
    tpu.vector_store %arg6[%c0_14, %c199], %24 {strides = array<i32>} : memref<4x324xf32, #tpu.memory_space<vmem>>, vector<4x16xf32>,
    %26 = vector.extract_strided_slice %3 {offsets = [0, 176], sizes = [4, 16], strides = [1, 1]} : vector<4x256xf32> to vector<4x16xf32>
    %c0_15 = arith.constant 0 : index
    %c217 = arith.constant 217 : index
    %27 = vector.load %arg6[%c0_15, %c217] : memref<4x324xf32, #tpu.memory_space<vmem>>, vector<4x16xf32>
    tpu.vector_store %arg6[%c0_15, %c217], %26 {strides = array<i32>} : memref<4x324xf32, #tpu.memory_space<vmem>>, vector<4x16xf32>,
    %28 = vector.extract_strided_slice %3 {offsets = [0, 192], sizes = [4, 16], strides = [1, 1]} : vector<4x256xf32> to vector<4x16xf32>
    %c0_16 = arith.constant 0 : index
    %c235 = arith.constant 235 : index
    %29 = vector.load %arg6[%c0_16, %c235] : memref<4x324xf32, #tpu.memory_space<vmem>>, vector<4x16xf32>
    tpu.vector_store %arg6[%c0_16, %c235], %28 {strides = array<i32>} : memref<4x324xf32, #tpu.memory_space<vmem>>, vector<4x16xf32>,
    %30 = vector.extract_strided_slice %3 {offsets = [0, 208], sizes = [4, 16], strides = [1, 1]} : vector<4x256xf32> to vector<4x16xf32>
    %c0_17 = arith.constant 0 : index
    %c253 = arith.constant 253 : index
    %31 = vector.load %arg6[%c0_17, %c253] : memref<4x324xf32, #tpu.memory_space<vmem>>, vector<4x16xf32>
    tpu.vector_store %arg6[%c0_17, %c253], %30 {strides = array<i32>} : memref<4x324xf32, #tpu.memory_space<vmem>>, vector<4x16xf32>,
    %32 = vector.extract_strided_slice %3 {offsets = [0, 224], sizes = [4, 16], strides = [1, 1]} : vector<4x256xf32> to vector<4x16xf32>
    %c0_18 = arith.constant 0 : index
    %c271 = arith.constant 271 : index
    %33 = vector.load %arg6[%c0_18, %c271] : memref<4x324xf32, #tpu.memory_space<vmem>>, vector<4x16xf32>
    tpu.vector_store %arg6[%c0_18, %c271], %32 {strides = array<i32>} : memref<4x324xf32, #tpu.memory_space<vmem>>, vector<4x16xf32>,
    %34 = vector.extract_strided_slice %3 {offsets = [0, 240], sizes = [4, 16], strides = [1, 1]} : vector<4x256xf32> to vector<4x16xf32>
    %c0_19 = arith.constant 0 : index
    %c289 = arith.constant 289 : index
    %35 = vector.load %arg6[%c0_19, %c289] : memref<4x324xf32, #tpu.memory_space<vmem>>, vector<4x16xf32>
    tpu.vector_store %arg6[%c0_19, %c289], %34 {strides = array<i32>} : memref<4x324xf32, #tpu.memory_space<vmem>>, vector<4x16xf32>,
    %c0_20 = arith.constant 0 : index
    %c0_21 = arith.constant 0 : index
    %36 = vector.load %arg6[%c0_20, %c0_21] : memref<4x324xf32, #tpu.memory_space<vmem>>, vector<4x286xf32>
    %c0_22 = arith.constant 0 : index
    %c1 = arith.constant 1 : index
    %37 = vector.load %arg6[%c0_22, %c1] : memref<4x324xf32, #tpu.memory_space<vmem>>, vector<4x286xf32>
    %c0_23 = arith.constant 0 : index
    %c2 = arith.constant 2 : index
    %38 = vector.load %arg6[%c0_23, %c2] : memref<4x324xf32, #tpu.memory_space<vmem>>, vector<4x286xf32>
    %c0_24 = arith.constant 0 : index
    %c18 = arith.constant 18 : index
    %39 = vector.load %arg6[%c0_24, %c18] : memref<4x324xf32, #tpu.memory_space<vmem>>, vector<4x286xf32>
    %c0_25 = arith.constant 0 : index
    %c19_26 = arith.constant 19 : index
    %40 = vector.load %arg6[%c0_25, %c19_26] : memref<4x324xf32, #tpu.memory_space<vmem>>, vector<4x286xf32>
    %c0_27 = arith.constant 0 : index
    %c20 = arith.constant 20 : index
    %41 = vector.load %arg6[%c0_27, %c20] : memref<4x324xf32, #tpu.memory_space<vmem>>, vector<4x286xf32>
    %c0_28 = arith.constant 0 : index
    %c36 = arith.constant 36 : index
    %42 = vector.load %arg6[%c0_28, %c36] : memref<4x324xf32, #tpu.memory_space<vmem>>, vector<4x286xf32>
    %c0_29 = arith.constant 0 : index
    %c37_30 = arith.constant 37 : index
    %43 = vector.load %arg6[%c0_29, %c37_30] : memref<4x324xf32, #tpu.memory_space<vmem>>, vector<4x286xf32>
    %c0_31 = arith.constant 0 : index
    %c38 = arith.constant 38 : index
    %44 = vector.load %arg6[%c0_31, %c38] : memref<4x324xf32, #tpu.memory_space<vmem>>, vector<4x286xf32>
    %cst_32 = arith.constant 0.000000e+00 : f32
    %45 = vector.broadcast %cst_32 : f32 to vector<4x286xf32>
    %46 = tpu.concatenate %36, %37, %38, %39, %40, %41, %42, %43, %44, %45 in 0 : vector<4x286xf32>, vector<4x286xf32>, vector<4x286xf32>, vector<4x286xf32>, vector<4x286xf32>, vector<4x286xf32>, vector<4x286xf32>, vector<4x286xf32>, vector<4x286xf32>, vector<4x286xf32> -> vector<40x286xf32>
    %c0_33 = arith.constant 0 : index
    %c0_34 = arith.constant 0 : index
    %47 = vector.load %arg3[%c0_33, %c0_34] : memref<8x40xf32, #tpu.memory_space<vmem>>, vector<8x40xf32>
    %cst_35 = arith.constant dense<0.000000e+00> : vector<8x286xf32>
    %48 = tpu.matmul %47, %46, %cst_35 {dimension_numbers = #tpu.dot_dimension_numbers<[1], [0], [0], [1], [0, 0, 1, 1], [], []>} : vector<8x40xf32>, vector<40x286xf32>, vector<8x286xf32> -> vector<8x286xf32>
    %c0_36 = arith.constant 0 : index
    %c0_37 = arith.constant 0 : index
    %49 = vector.load %arg4[%c0_36, %c0_37] : memref<8x1xf32, #tpu.memory_space<vmem>>, vector<8x1xf32>
    %50 = vector.broadcast %49 : vector<8x1xf32> to vector<8x286xf32>
    %51 = arith.addf %48, %50 : vector<8x286xf32>
    %52 = vector.extract_strided_slice %51 {offsets = [0, 0], sizes = [8, 16], strides = [1, 1]} : vector<8x286xf32> to vector<8x16xf32>
    %c0_38 = arith.constant 0 : index
    %c0_39 = arith.constant 0 : index
    %c0_40 = arith.constant 0 : index
    %53 = vector.load %arg5[%c0_38, %c0_39, %c0_40] : memref<1x8x256xf32, #tpu.memory_space<vmem>>, vector<1x8x16xf32>
    %54 = vector.shape_cast %53 : vector<1x8x16xf32> to vector<8x16xf32>
    %55 = vector.shape_cast %52 : vector<8x16xf32> to vector<1x8x16xf32>
    tpu.vector_store %arg5[%c0_38, %c0_39, %c0_40], %55 {strides = array<i32>} : memref<1x8x256xf32, #tpu.memory_space<vmem>>, vector<1x8x16xf32>,
    %56 = vector.extract_strided_slice %51 {offsets = [0, 18], sizes = [8, 16], strides = [1, 1]} : vector<8x286xf32> to vector<8x16xf32>
    %c0_41 = arith.constant 0 : index
    %c0_42 = arith.constant 0 : index
    %c16 = arith.constant 16 : index
    %57 = vector.load %arg5[%c0_41, %c0_42, %c16] : memref<1x8x256xf32, #tpu.memory_space<vmem>>, vector<1x8x16xf32>
    %58 = vector.shape_cast %57 : vector<1x8x16xf32> to vector<8x16xf32>
    %59 = vector.shape_cast %56 : vector<8x16xf32> to vector<1x8x16xf32>
    tpu.vector_store %arg5[%c0_41, %c0_42, %c16], %59 {strides = array<i32>} : memref<1x8x256xf32, #tpu.memory_space<vmem>>, vector<1x8x16xf32>,
    %60 = vector.extract_strided_slice %51 {offsets = [0, 36], sizes = [8, 16], strides = [1, 1]} : vector<8x286xf32> to vector<8x16xf32>
    %c0_43 = arith.constant 0 : index
    %c0_44 = arith.constant 0 : index
    %c32 = arith.constant 32 : index
    %61 = vector.load %arg5[%c0_43, %c0_44, %c32] : memref<1x8x256xf32, #tpu.memory_space<vmem>>, vector<1x8x16xf32>
    %62 = vector.shape_cast %61 : vector<1x8x16xf32> to vector<8x16xf32>
    %63 = vector.shape_cast %60 : vector<8x16xf32> to vector<1x8x16xf32>
    tpu.vector_store %arg5[%c0_43, %c0_44, %c32], %63 {strides = array<i32>} : memref<1x8x256xf32, #tpu.memory_space<vmem>>, vector<1x8x16xf32>,
    %64 = vector.extract_strided_slice %51 {offsets = [0, 54], sizes = [8, 16], strides = [1, 1]} : vector<8x286xf32> to vector<8x16xf32>
    %c0_45 = arith.constant 0 : index
    %c0_46 = arith.constant 0 : index
    %c48 = arith.constant 48 : index
    %65 = vector.load %arg5[%c0_45, %c0_46, %c48] : memref<1x8x256xf32, #tpu.memory_space<vmem>>, vector<1x8x16xf32>
    %66 = vector.shape_cast %65 : vector<1x8x16xf32> to vector<8x16xf32>
    %67 = vector.shape_cast %64 : vector<8x16xf32> to vector<1x8x16xf32>
    tpu.vector_store %arg5[%c0_45, %c0_46, %c48], %67 {strides = array<i32>} : memref<1x8x256xf32, #tpu.memory_space<vmem>>, vector<1x8x16xf32>,
    %68 = vector.extract_strided_slice %51 {offsets = [0, 72], sizes = [8, 16], strides = [1, 1]} : vector<8x286xf32> to vector<8x16xf32>
    %c0_47 = arith.constant 0 : index
    %c0_48 = arith.constant 0 : index
    %c64 = arith.constant 64 : index
    %69 = vector.load %arg5[%c0_47, %c0_48, %c64] : memref<1x8x256xf32, #tpu.memory_space<vmem>>, vector<1x8x16xf32>
    %70 = vector.shape_cast %69 : vector<1x8x16xf32> to vector<8x16xf32>
    %71 = vector.shape_cast %68 : vector<8x16xf32> to vector<1x8x16xf32>
    tpu.vector_store %arg5[%c0_47, %c0_48, %c64], %71 {strides = array<i32>} : memref<1x8x256xf32, #tpu.memory_space<vmem>>, vector<1x8x16xf32>,
    %72 = vector.extract_strided_slice %51 {offsets = [0, 90], sizes = [8, 16], strides = [1, 1]} : vector<8x286xf32> to vector<8x16xf32>
    %c0_49 = arith.constant 0 : index
    %c0_50 = arith.constant 0 : index
    %c80 = arith.constant 80 : index
    %73 = vector.load %arg5[%c0_49, %c0_50, %c80] : memref<1x8x256xf32, #tpu.memory_space<vmem>>, vector<1x8x16xf32>
    %74 = vector.shape_cast %73 : vector<1x8x16xf32> to vector<8x16xf32>
    %75 = vector.shape_cast %72 : vector<8x16xf32> to vector<1x8x16xf32>
    tpu.vector_store %arg5[%c0_49, %c0_50, %c80], %75 {strides = array<i32>} : memref<1x8x256xf32, #tpu.memory_space<vmem>>, vector<1x8x16xf32>,
    %76 = vector.extract_strided_slice %51 {offsets = [0, 108], sizes = [8, 16], strides = [1, 1]} : vector<8x286xf32> to vector<8x16xf32>
    %c0_51 = arith.constant 0 : index
    %c0_52 = arith.constant 0 : index
    %c96 = arith.constant 96 : index
    %77 = vector.load %arg5[%c0_51, %c0_52, %c96] : memref<1x8x256xf32, #tpu.memory_space<vmem>>, vector<1x8x16xf32>
    %78 = vector.shape_cast %77 : vector<1x8x16xf32> to vector<8x16xf32>
    %79 = vector.shape_cast %76 : vector<8x16xf32> to vector<1x8x16xf32>
    tpu.vector_store %arg5[%c0_51, %c0_52, %c96], %79 {strides = array<i32>} : memref<1x8x256xf32, #tpu.memory_space<vmem>>, vector<1x8x16xf32>,
    %80 = vector.extract_strided_slice %51 {offsets = [0, 126], sizes = [8, 16], strides = [1, 1]} : vector<8x286xf32> to vector<8x16xf32>
    %c0_53 = arith.constant 0 : index
    %c0_54 = arith.constant 0 : index
    %c112 = arith.constant 112 : index
    %81 = vector.load %arg5[%c0_53, %c0_54, %c112] : memref<1x8x256xf32, #tpu.memory_space<vmem>>, vector<1x8x16xf32>
    %82 = vector.shape_cast %81 : vector<1x8x16xf32> to vector<8x16xf32>
    %83 = vector.shape_cast %80 : vector<8x16xf32> to vector<1x8x16xf32>
    tpu.vector_store %arg5[%c0_53, %c0_54, %c112], %83 {strides = array<i32>} : memref<1x8x256xf32, #tpu.memory_space<vmem>>, vector<1x8x16xf32>,
    %84 = vector.extract_strided_slice %51 {offsets = [0, 144], sizes = [8, 16], strides = [1, 1]} : vector<8x286xf32> to vector<8x16xf32>
    %c0_55 = arith.constant 0 : index
    %c0_56 = arith.constant 0 : index
    %c128 = arith.constant 128 : index
    %85 = vector.load %arg5[%c0_55, %c0_56, %c128] : memref<1x8x256xf32, #tpu.memory_space<vmem>>, vector<1x8x16xf32>
    %86 = vector.shape_cast %85 : vector<1x8x16xf32> to vector<8x16xf32>
    %87 = vector.shape_cast %84 : vector<8x16xf32> to vector<1x8x16xf32>
    tpu.vector_store %arg5[%c0_55, %c0_56, %c128], %87 {strides = array<i32>} : memref<1x8x256xf32, #tpu.memory_space<vmem>>, vector<1x8x16xf32>,
    %88 = vector.extract_strided_slice %51 {offsets = [0, 162], sizes = [8, 16], strides = [1, 1]} : vector<8x286xf32> to vector<8x16xf32>
    %c0_57 = arith.constant 0 : index
    %c0_58 = arith.constant 0 : index
    %c144 = arith.constant 144 : index
    %89 = vector.load %arg5[%c0_57, %c0_58, %c144] : memref<1x8x256xf32, #tpu.memory_space<vmem>>, vector<1x8x16xf32>
    %90 = vector.shape_cast %89 : vector<1x8x16xf32> to vector<8x16xf32>
    %91 = vector.shape_cast %88 : vector<8x16xf32> to vector<1x8x16xf32>
    tpu.vector_store %arg5[%c0_57, %c0_58, %c144], %91 {strides = array<i32>} : memref<1x8x256xf32, #tpu.memory_space<vmem>>, vector<1x8x16xf32>,
    %92 = vector.extract_strided_slice %51 {offsets = [0, 180], sizes = [8, 16], strides = [1, 1]} : vector<8x286xf32> to vector<8x16xf32>
    %c0_59 = arith.constant 0 : index
    %c0_60 = arith.constant 0 : index
    %c160 = arith.constant 160 : index
    %93 = vector.load %arg5[%c0_59, %c0_60, %c160] : memref<1x8x256xf32, #tpu.memory_space<vmem>>, vector<1x8x16xf32>
    %94 = vector.shape_cast %93 : vector<1x8x16xf32> to vector<8x16xf32>
    %95 = vector.shape_cast %92 : vector<8x16xf32> to vector<1x8x16xf32>
    tpu.vector_store %arg5[%c0_59, %c0_60, %c160], %95 {strides = array<i32>} : memref<1x8x256xf32, #tpu.memory_space<vmem>>, vector<1x8x16xf32>,
    %96 = vector.extract_strided_slice %51 {offsets = [0, 198], sizes = [8, 16], strides = [1, 1]} : vector<8x286xf32> to vector<8x16xf32>
    %c0_61 = arith.constant 0 : index
    %c0_62 = arith.constant 0 : index
    %c176 = arith.constant 176 : index
    %97 = vector.load %arg5[%c0_61, %c0_62, %c176] : memref<1x8x256xf32, #tpu.memory_space<vmem>>, vector<1x8x16xf32>
    %98 = vector.shape_cast %97 : vector<1x8x16xf32> to vector<8x16xf32>
    %99 = vector.shape_cast %96 : vector<8x16xf32> to vector<1x8x16xf32>
    tpu.vector_store %arg5[%c0_61, %c0_62, %c176], %99 {strides = array<i32>} : memref<1x8x256xf32, #tpu.memory_space<vmem>>, vector<1x8x16xf32>,
    %100 = vector.extract_strided_slice %51 {offsets = [0, 216], sizes = [8, 16], strides = [1, 1]} : vector<8x286xf32> to vector<8x16xf32>
    %c0_63 = arith.constant 0 : index
    %c0_64 = arith.constant 0 : index
    %c192 = arith.constant 192 : index
    %101 = vector.load %arg5[%c0_63, %c0_64, %c192] : memref<1x8x256xf32, #tpu.memory_space<vmem>>, vector<1x8x16xf32>
    %102 = vector.shape_cast %101 : vector<1x8x16xf32> to vector<8x16xf32>
    %103 = vector.shape_cast %100 : vector<8x16xf32> to vector<1x8x16xf32>
    tpu.vector_store %arg5[%c0_63, %c0_64, %c192], %103 {strides = array<i32>} : memref<1x8x256xf32, #tpu.memory_space<vmem>>, vector<1x8x16xf32>,
    %104 = vector.extract_strided_slice %51 {offsets = [0, 234], sizes = [8, 16], strides = [1, 1]} : vector<8x286xf32> to vector<8x16xf32>
    %c0_65 = arith.constant 0 : index
    %c0_66 = arith.constant 0 : index
    %c208 = arith.constant 208 : index
    %105 = vector.load %arg5[%c0_65, %c0_66, %c208] : memref<1x8x256xf32, #tpu.memory_space<vmem>>, vector<1x8x16xf32>
    %106 = vector.shape_cast %105 : vector<1x8x16xf32> to vector<8x16xf32>
    %107 = vector.shape_cast %104 : vector<8x16xf32> to vector<1x8x16xf32>
    tpu.vector_store %arg5[%c0_65, %c0_66, %c208], %107 {strides = array<i32>} : memref<1x8x256xf32, #tpu.memory_space<vmem>>, vector<1x8x16xf32>,
    %108 = vector.extract_strided_slice %51 {offsets = [0, 252], sizes = [8, 16], strides = [1, 1]} : vector<8x286xf32> to vector<8x16xf32>
    %c0_67 = arith.constant 0 : index
    %c0_68 = arith.constant 0 : index
    %c224 = arith.constant 224 : index
    %109 = vector.load %arg5[%c0_67, %c0_68, %c224] : memref<1x8x256xf32, #tpu.memory_space<vmem>>, vector<1x8x16xf32>
    %110 = vector.shape_cast %109 : vector<1x8x16xf32> to vector<8x16xf32>
    %111 = vector.shape_cast %108 : vector<8x16xf32> to vector<1x8x16xf32>
    tpu.vector_store %arg5[%c0_67, %c0_68, %c224], %111 {strides = array<i32>} : memref<1x8x256xf32, #tpu.memory_space<vmem>>, vector<1x8x16xf32>,
    %112 = vector.extract_strided_slice %51 {offsets = [0, 270], sizes = [8, 16], strides = [1, 1]} : vector<8x286xf32> to vector<8x16xf32>
    %c0_69 = arith.constant 0 : index
    %c0_70 = arith.constant 0 : index
    %c240 = arith.constant 240 : index
    %113 = vector.load %arg5[%c0_69, %c0_70, %c240] : memref<1x8x256xf32, #tpu.memory_space<vmem>>, vector<1x8x16xf32>
    %114 = vector.shape_cast %113 : vector<1x8x16xf32> to vector<8x16xf32>
    %115 = vector.shape_cast %112 : vector<8x16xf32> to vector<1x8x16xf32>
    tpu.vector_store %arg5[%c0_69, %c0_70, %c240], %115 {strides = array<i32>} : memref<1x8x256xf32, #tpu.memory_space<vmem>>, vector<1x8x16xf32>,
    return
  }
  func.func @transform_0(%arg0: i32, %arg1: i32) -> (i32, i32, i32) {
    %c0_i32 = arith.constant 0 : i32
    %c0_i32_0 = arith.constant 0 : i32
    %c0_i32_1 = arith.constant 0 : i32
    return %arg0, %c0_i32, %c0_i32_0 : i32, i32, i32
  }
  func.func @transform_1(%arg0: i32, %arg1: i32) -> (i32, i32) {
    %c0_i32 = arith.constant 0 : i32
    %c0_i32_0 = arith.constant 0 : i32
    %c0_i32_1 = arith.constant 0 : i32
    return %c0_i32, %c0_i32_0 : i32, i32
  }
  func.func @transform_2(%arg0: i32, %arg1: i32) -> (i32, i32) {
    %c0_i32 = arith.constant 0 : i32
    %c0_i32_0 = arith.constant 0 : i32
    %c0_i32_1 = arith.constant 0 : i32
    return %c0_i32, %c0_i32_0 : i32, i32
  }
  func.func @transform_3(%arg0: i32, %arg1: i32) -> (i32, i32, i32) {
    %c0_i32 = arith.constant 0 : i32
    %c0_i32_0 = arith.constant 0 : i32
    return %arg0, %c0_i32, %arg1 : i32, i32, i32
  }
}

</mosaic_0001>

<llo_original>
// kernel: tpu_custom_call.1
$region0: #{tpu_custom_call.1}
  #allocation0 [shape = 'u32[]', space=smem, size = 0x4, offset = 0x4, fixed_abs, tag = 'smem constant byte address 0x4 - core index']
  #allocation1 [shape = 'u32[144,128]{1,0:T(1,128)}', space=vmem, size = 0x12000, scoped, tag = 'internal scratch']
  #allocation2 [shape = 'f32[4,324]{1,0:T(4,128)}', space=vmem, size = 0x1800, scoped, tag = 'scratch operand']
  %s0 = inlined_call_operand.hbm [shape: f32[2,4,256], index: 0, kind: input, shape index: {}]
  %s1 = inlined_call_operand.vmem [shape: f32[8,40], index: 1, kind: input, shape index: {}]
  %s2 = inlined_call_operand.vmem [shape: f32[8,1], index: 2, kind: input, shape index: {}]
  %s3 = inlined_call_operand.hbm [shape: f32[2,8,256], index: 3, kind: output, shape index: {}]
  %s4 = sld [smem:[#allocation0]]
  $region49: #{tpu_custom_call.1} parent=0
    _
  %s6 = ssub.s32 1, %s4
  %s7 = scalar_select 0, %s6, %s4
  $region1: #{tpu_custom_call.1} parent=0
    #allocation3 [shape = 'u8[8192]{0}', space=vmem, size = 0x2000, scoped, tag = 'input window, operand 0']
    #allocation4 [shape = 's32[2]{0}', space=sflag, size = 0x8, scoped, tag = 'scoped memory for tpu_custom_call.1']
    #allocation5 [shape = 's32[2]{0}', space=sflag, size = 0x8, scoped, tag = 'scoped memory for tpu_custom_call.1']
    #allocation6 [shape = 'u8[16384]{0}', space=vmem, size = 0x4000, scoped, tag = 'output window, operand 0']
    %8 = vsyncpa [#allocation4], 0
    %s9 = scalar_lea.sflag [#allocation4], 1
    %10 = vsyncpa %s9, 0
    %11 = vsyncpa [#allocation5], 0
    %s12 = scalar_lea.sflag [#allocation5], 1
    %13 = vsyncpa %s12, 0
    loop: start=0, step=1, limit=4
    $region2: #{tpu_custom_call.1} parent=1 // loop_pre_header
      _
    $region3: #{tpu_custom_call.1} parent=1 // loop_header
      %s15 = sphi 0, %s19
      %p16 = scmp.ge.s32.totalorder %s15, 4
      %s22 = sphi 0, %s34
      %s23 = sphi 0, %s30
      %s24 = sphi 0, %s22
      %s25 = sphi 0, %s23
      %s26 = sphi 0, %s24
      %s27 = sphi 0, %s25
      %s37 = sphi 0, %s39
      %s40 = sphi 0, %s37
      %s41 = sphi 0, %s40
      %s57 = sphi 0, %s41
      %s61 = sphi 0, %s61
      %s63 = sphi 0, %s61
      %s64 = sphi 0, %s63
      %s78 = sphi 0, %s64
      %s82 = sphi 0, %s82
      %s84 = sphi 0, %s82
      %s85 = sphi 0, %s84
      %s99 = sphi 0, %s85
      %s107 = sphi 0, %s109
      %s110 = sphi 0, %s107
      %s111 = sphi 0, %s110
      %s127 = sphi 0, %s111
    $region4: #{tpu_custom_call.1} parent=1 // loop_header_branch
      %18 = sbr.rel (%p16) target = $region8
    $region5: #{tpu_custom_call.1} parent=1 // loop_body
      %s20 = ssub.s32 %s15, 1
      %s21 = ssub.s32 %s15, 2
      %s28 = sadd.s32 1, %s23
      %p29 = scmp.ge.s32.totalorder %s28, 1
      %s30 = scalar_select %p29, 0, %s28
      %s31 = sadd.s32 1, %s22
      %s32 = scalar_select %p29, %s31, %s22
      %p33 = scmp.ge.s32.totalorder %s32, 2
      %s34 = scalar_select %p33, 0, %s32
      %s35 = ssub.s32 %s22, %s34
      %p36 = scmp.eq.s32.totalorder %s35, 0
      %s38 = sadd.s32 %s37, 1
      %s39 = scalar_select %p36, %s37, %s38
      %p42 = pneg %p36
      %p43 = scmp.eq.s32.totalorder %s15, 1
      %p44 = por %p42, %p43
      %p45 = scmp.ne.s32.totalorder %s37, %s40
      %p46 = scmp.eq.s32.totalorder %s15, 0
      %p47 = por %p45, %p46
      %p48 = scmp.ne.s32.totalorder %s37, %s40
      %p49 = scmp.eq.s32.totalorder %s20, 1
      %p50 = por %p48, %p49
      %p51 = scmp.ne.s32.totalorder %s40, %s41
      %p52 = scmp.eq.s32.totalorder %s20, 0
      %p53 = por %p51, %p52
      %p54 = scmp.ne.s32.totalorder %s40, %s41
      %p55 = scmp.eq.s32.totalorder %s21, 1
      %p56 = por %p54, %p55
      %p58 = scmp.ne.s32.totalorder %s41, %s57
      %p59 = scmp.eq.s32.totalorder %s21, 0
      %p60 = por %p58, %p59
      %s62 = sadd.s32 %s61, 1
      %p65 = scmp.eq.s32.totalorder %s15, 1
      %p66 = scmp.ne.s32.totalorder %s61, %s63
      %p67 = scmp.eq.s32.totalorder %s15, 0
      %p68 = por %p66, %p67
      %p69 = scmp.ne.s32.totalorder %s61, %s63
      %p70 = scmp.eq.s32.totalorder %s20, 1
      %p71 = por %p69, %p70
      %p72 = scmp.ne.s32.totalorder %s63, %s64
      %p73 = scmp.eq.s32.totalorder %s20, 0
      %p74 = por %p72, %p73
      %p75 = scmp.ne.s32.totalorder %s63, %s64
      %p76 = scmp.eq.s32.totalorder %s21, 1
      %p77 = por %p75, %p76
      %p79 = scmp.ne.s32.totalorder %s64, %s78
      %p80 = scmp.eq.s32.totalorder %s21, 0
      %p81 = por %p79, %p80
      %s83 = sadd.s32 %s82, 1
      %p86 = scmp.eq.s32.totalorder %s15, 1
      %p87 = scmp.ne.s32.totalorder %s82, %s84
      %p88 = scmp.eq.s32.totalorder %s15, 0
      %p89 = por %p87, %p88
      %p90 = scmp.ne.s32.totalorder %s82, %s84
      %p91 = scmp.eq.s32.totalorder %s20, 1
      %p92 = por %p90, %p91
      %p93 = scmp.ne.s32.totalorder %s84, %s85
      %p94 = scmp.eq.s32.totalorder %s20, 0
      %p95 = por %p93, %p94
      %p96 = scmp.ne.s32.totalorder %s84, %s85
      %p97 = scmp.eq.s32.totalorder %s21, 1
      %p98 = por %p96, %p97
      %p100 = scmp.ne.s32.totalorder %s85, %s99
      %p101 = scmp.eq.s32.totalorder %s21, 0
      %p102 = por %p100, %p101
      %s103 = ssub.s32 %s22, %s34
      %s104 = ssub.s32 %s23, %s30
      %s105 = sor.u32 %s103, %s104
      %p106 = scmp.eq.s32.totalorder %s105, 0
      %s108 = sadd.s32 %s107, 1
      %s109 = scalar_select %p106, %s107, %s108
      %p112 = pneg %p106
      %p113 = scmp.eq.s32.totalorder %s15, 1
      %p114 = por %p112, %p113
      %p115 = scmp.ne.s32.totalorder %s107, %s110
      %p116 = scmp.eq.s32.totalorder %s15, 0
      %p117 = por %p115, %p116
      %p118 = scmp.ne.s32.totalorder %s107, %s110
      %p119 = scmp.eq.s32.totalorder %s20, 1
      %p120 = por %p118, %p119
      %p121 = scmp.ne.s32.totalorder %s110, %s111
      %p122 = scmp.eq.s32.totalorder %s20, 0
      %p123 = por %p121, %p122
      %p124 = scmp.ne.s32.totalorder %s110, %s111
      %p125 = scmp.eq.s32.totalorder %s21, 1
      %p126 = por %p124, %p125
      %p128 = scmp.ne.s32.totalorder %s111, %s127
      %p129 = scmp.eq.s32.totalorder %s21, 0
      %p130 = por %p128, %p129
      %p131 = scmp.le.s32.totalorder 1, %s15
      %p132 = scmp.lt.s32.totalorder %s15, 3
      %p133 = pnand %p131, %p132
      %p134 = pneg %p133
      // Predicated region
      $region9: #{tpu_custom_call.1} parent=5 // pred_check
        _
      $region10: #{tpu_custom_call.1} parent=5 // pred_check_branch
        %136 = sbr.rel (%p133) target = $region12
      $region11: #{tpu_custom_call.1} parent=5 // pred_region
        %s137 = ssub.s32 %s15, 1
        // Predicated region
        $region13: #{tpu_custom_call.1} parent=11 // pred_check
          %p138 = pneg %p74
        $region14: #{tpu_custom_call.1} parent=11 // pred_check_branch
          %140 = sbr.rel (%p138) target = $region16
        $region15: #{tpu_custom_call.1} parent=11 // pred_region
          _
        $region16: #{tpu_custom_call.1} parent=11 // pred_fallthru
          _
        // Predicated region
        $region17: #{tpu_custom_call.1} parent=11 // pred_check
          %p141 = pneg %p95
        $region18: #{tpu_custom_call.1} parent=11 // pred_check_branch
          %143 = sbr.rel (%p141) target = $region20
        $region19: #{tpu_custom_call.1} parent=11 // pred_region
          _
        $region20: #{tpu_custom_call.1} parent=11 // pred_fallthru
          _
      $region12: #{tpu_custom_call.1} parent=5 // pred_fallthru
        _
      %p144 = scmp.lt.s32.totalorder %s15, 2
      // Predicated region
      $region21: #{tpu_custom_call.1} parent=5 // pred_check
        %p145 = pneg %p144
      $region22: #{tpu_custom_call.1} parent=5 // pred_check_branch
        %147 = sbr.rel (%p145) target = $region24
      $region23: #{tpu_custom_call.1} parent=5 // pred_region
        // Predicated region
        $region25: #{tpu_custom_call.1} parent=23 // pred_check
          %p148 = pneg %p47
        $region26: #{tpu_custom_call.1} parent=23 // pred_check_branch
          %150 = sbr.rel (%p148) target = $region28
        $region27: #{tpu_custom_call.1} parent=23 // pred_region
          %s151 = sand.u32 %s37, 1
          %s152 = scalar_lea.sflag [#allocation4], %s151
          %s153 = sand.u32 %s37, 1
          %s154 = smul.addr %s153, 8
          %s155 = scalar_lea.vmem [#allocation3], %s154
          %s157 = ssub.s32 128, 128
          %158 = vsyncadd %s152, %s157
          %s159 = smul.addr %s22, 2
          %s160 = smul.addr %s159, 64
          %s161 = scalar_lea.hbm %s0, %s160
          %s163 = sshll.u32 %s155, 4
          %s164 = int_to_ptr.vmem [resolvable:$true] %s163
          %166 = dma.hbm_to_vmem [thread:$0]  %s161, 128, %s164, %s152
        $region28: #{tpu_custom_call.1} parent=23 // pred_fallthru
          _
      $region24: #{tpu_custom_call.1} parent=5 // pred_fallthru
        _
      %p167 = scmp.le.s32.totalorder 1, %s15
      %p168 = scmp.lt.s32.totalorder %s15, 3
      %p169 = pnand %p167, %p168
      %p170 = pneg %p169
      // Predicated region
      $region29: #{tpu_custom_call.1} parent=5 // pred_check
        _
      $region30: #{tpu_custom_call.1} parent=5 // pred_check_branch
        %172 = sbr.rel (%p169) target = $region32
      $region31: #{tpu_custom_call.1} parent=5 // pred_region
        %s173 = ssub.s32 %s15, 1
        %s174 = sand.u32 %s40, 1
        %s175 = scalar_lea.sflag [#allocation4], %s174
        %s176 = sand.u32 %s40, 1
        %s177 = smul.addr %s176, 8
        %s178 = scalar_lea.vmem [#allocation3], %s177
        // Predicated region
        $region33: #{tpu_custom_call.1} parent=31 // pred_check
          %p179 = pneg %p53
        $region34: #{tpu_custom_call.1} parent=31 // pred_check_branch
          %181 = sbr.rel (%p179) target = $region36
        $region35: #{tpu_custom_call.1} parent=31 // pred_region
          %182 = dma.done %s175, 128
        $region36: #{tpu_custom_call.1} parent=31 // pred_fallthru
          _
        %s183 = sand.u32 %s40, 1
        %s184 = scalar_lea.sflag [#allocation4], %s183
        %s185 = sand.u32 %s40, 1
        %s186 = smul.addr %s185, 8
        %s187 = scalar_lea.vmem [#allocation3], %s186
        %p188 = pneg %p53
        %p189 = pneg %p50
        %p190 = pneg %p74
        %p191 = pneg %p71
        %p192 = pneg %p95
        %p193 = pneg %p92
        %p194 = pneg %p123
        %p195 = pneg %p120
        %s196 = sand.u32 %s110, 1
        %s197 = scalar_lea.sflag [#allocation5], %s196
        %s198 = sand.u32 %s110, 1
        %s199 = smul.addr %s198, 16
        %s200 = scalar_lea.vmem [#allocation6], %s199
        %s201 = smul.u32 2, %s25
        %202 = vst [vmem:[#allocation2] sm:$0xff] 0.0
        %vm203 = vcmask 551936
        %204 = vst.msk [vmem:[#allocation2 + $0x8] sm:$0xf] %vm203, 0.0
        %v205 = vld [vmem:[%s178] sm:$0xff]
        %207 = vrot.lane.b32.xlu0 %v205, 19
        %v208 = vpop.permute.xlu0 %207
        %vm210 = vcmask 281752
        %211 = vst.msk [vmem:[#allocation2] sm:$0xf] %vm210, %v208
        %212 = vrot.lane.b32.xlu0 %v205, 21
        %v213 = vpop.permute.xlu0 %212
        %vm215 = vcmask 429352
        %216 = vst.msk [vmem:[#allocation2] sm:$0xf] %vm215, %v213
        %217 = vrot.lane.b32.xlu0 %v205, 23
        %v218 = vpop.permute.xlu0 %217
        %vm220 = vcmask 576952
        %221 = vst.msk [vmem:[#allocation2] sm:$0xf] %vm220, %v218
        %222 = vrot.lane.b32.xlu0 %v205, 25
        %v223 = vpop.permute.xlu0 %222
        %vm225 = vcmask 724552
        %226 = vst.msk [vmem:[#allocation2] sm:$0xf] %vm225, %v223
        %227 = vrot.lane.b32.xlu0 %v205, 27
        %v228 = vpop.permute.xlu0 %227
        %vm230 = vcmask 872152
        %231 = vst.msk [vmem:[#allocation2] sm:$0xf] %vm230, %v228
        %232 = vrot.lane.b32.xlu0 %v205, 29
        %v233 = vpop.permute.xlu0 %232
        %vm235 = vcmask 1019752
        %236 = vst.msk [vmem:[#allocation2] sm:$0xf] %vm235, %v233
        %237 = vrot.lane.b32.xlu0 %v205, 31
        %v238 = vpop.permute.xlu0 %237
        %v239 = vrot.slane %v238, 4
        %vm240 = vcmask 252928
        %v241 = vsel %vm240, %v239, %v238
        %vm243 = vcmask 1044472
        %vm244 = vcmask 121860
        %vm245 = vmor %vm244, %vm243
        %246 = vst.msk [vmem:[#allocation2] sm:$0xff] %vm245, %v241
        %247 = vrot.lane.b32.xlu0 %v205, 33
        %v248 = vpop.permute.xlu0 %247
        %vm250 = vcmask 265352
        %251 = vst.msk [vmem:[#allocation2 + $0x4] sm:$0xf] %vm250, %v248
        %252 = vrot.lane.b32.xlu0 %v205, 35
        %v253 = vpop.permute.xlu0 %252
        %v254 = vrot.slane %v253, 4
        %vm255 = vcmask 285696
        %v256 = vsel %vm255, %v253, %v254
        %vm258 = vcmask 412952
        %259 = vst.msk [vmem:[#allocation2 + $0x4] sm:$0xf] %vm258, %v256
        %260 = vrot.lane.b32.xlu0 %v205, 37
        %v261 = vpop.permute.xlu0 %260
        %v262 = vrot.slane %v261, 4
        %vm263 = vcmask 302080
        %v264 = vsel %vm263, %v261, %v262
        %vm266 = vcmask 560552
        %267 = vst.msk [vmem:[#allocation2 + $0x4] sm:$0xf] %vm266, %v264
        %268 = vrot.lane.b32.xlu0 %v205, 39
        %v269 = vpop.permute.xlu0 %268
        %v270 = vrot.slane %v269, 4
        %vm271 = vcmask 318464
        %v272 = vsel %vm271, %v269, %v270
        %vm274 = vcmask 708152
        %275 = vst.msk [vmem:[#allocation2 + $0x4] sm:$0xf] %vm274, %v272
        %276 = vrot.lane.b32.xlu0 %v205, 41
        %v277 = vpop.permute.xlu0 %276
        %v278 = vrot.slane %v277, 4
        %vm279 = vcmask 334848
        %v280 = vsel %vm279, %v277, %v278
        %vm282 = vcmask 855752
        %283 = vst.msk [vmem:[#allocation2 + $0x4] sm:$0xf] %vm282, %v280
        %284 = vrot.lane.b32.xlu0 %v205, 43
        %v285 = vpop.permute.xlu0 %284
        %v286 = vrot.slane %v285, 4
        %vm287 = vcmask 351232
        %v288 = vsel %vm287, %v285, %v286
        %vm290 = vcmask 1003352
        %291 = vst.msk [vmem:[#allocation2 + $0x4] sm:$0xf] %vm290, %v288
        %292 = vrot.lane.b32.xlu0 %v205, 45
        %v293 = vpop.permute.xlu0 %292
        %v294 = vrot.slane %v293, 4
        %vm295 = vcmask 367616
        %v296 = vsel %vm295, %v293, %v294
        %vm298 = vcmask 1044456
        %vm299 = vcmask 105476
        %vm300 = vmor %vm299, %vm298
        %301 = vst.msk [vmem:[#allocation2 + $0x4] sm:$0xff] %vm300, %v296
        %302 = vrot.lane.b32.xlu0 %v205, 47
        %v303 = vpop.permute.xlu0 %302
        %v304 = vrot.slane %v303, 4
        %vm306 = vcmask 248952
        %307 = vst.msk [vmem:[#allocation2 + $0x8] sm:$0xf] %vm306, %v304
        %308 = vrot.lane.b32.xlu0 %v205, 49
        %v309 = vpop.permute.xlu0 %308
        %v310 = vrot.slane %v309, 4
        %vm312 = vcmask 396552
        %313 = vst.msk [vmem:[#allocation2 + $0x8] sm:$0xf] %vm312, %v310
        %v314 = vld [vmem:[#allocation2] sm:$0xff]
        %v315 = vld [vmem:[#allocation2 + $0x8] sm:$0xf]
        %v318 = vcombine.high %v314, %v314
        %v320 = vcombine.low %v314, %v314
        %v321 = vcombine.low %v315, %v315
        %322 = vrot.lane.b32.xlu0 %v320, 127
        %v323 = vpop.permute.xlu0 %322
        %324 = vrot.lane.b32.xlu0 %v314, 127
        %v325 = vpop.permute.xlu0 %324
        %326 = vrot.lane.b32.xlu0 %v321, 127
        %v327 = vpop.permute.xlu0 %326
        %vm328 = vcmask 1039360
        %v329 = vsel %vm328, %v323, %v325
        %v330 = vsel %vm328, %v325, %v327
        %334 = vrot.lane.b32.xlu0 %v314, 126
        %v335 = vpop.permute.xlu0 %334
        %336 = vrot.lane.b32.xlu0 %v318, 126
        %v337 = vpop.permute.xlu0 %336
        %338 = vrot.lane.b32.xlu0 %v315, 126
        %v339 = vpop.permute.xlu0 %338
        %vm340 = vcmask 1031168
        %v341 = vsel %vm340, %v335, %v337
        %v342 = vsel %vm340, %v337, %v339
        %346 = vrot.lane.b32.xlu0 %v320, 110
        %v347 = vpop.permute.xlu0 %346
        %348 = vrot.lane.b32.xlu0 %v314, 110
        %v349 = vpop.permute.xlu0 %348
        %350 = vrot.lane.b32.xlu0 %v321, 110
        %v351 = vpop.permute.xlu0 %350
        %vm352 = vcmask 900096
        %v353 = vsel %vm352, %v347, %v349
        %v354 = vsel %vm352, %v349, %v351
        %358 = vrot.lane.b32.xlu0 %v314, 109
        %v359 = vpop.permute.xlu0 %358
        %360 = vrot.lane.b32.xlu0 %v318, 109
        %v361 = vpop.permute.xlu0 %360
        %362 = vrot.lane.b32.xlu0 %v315, 109
        %v363 = vpop.permute.xlu0 %362
        %vm364 = vcmask 891904
        %v365 = vsel %vm364, %v359, %v361
        %v366 = vsel %vm364, %v361, %v363
        %370 = vrot.lane.b32.xlu0 %v320, 108
        %v371 = vpop.permute.xlu0 %370
        %372 = vrot.lane.b32.xlu0 %v314, 108
        %v373 = vpop.permute.xlu0 %372
        %374 = vrot.lane.b32.xlu0 %v321, 108
        %v375 = vpop.permute.xlu0 %374
        %vm376 = vcmask 883712
        %v377 = vsel %vm376, %v371, %v373
        %v378 = vsel %vm376, %v373, %v375
        %382 = vrot.lane.b32.xlu0 %v314, 92
        %v383 = vpop.permute.xlu0 %382
        %384 = vrot.lane.b32.xlu0 %v318, 92
        %v385 = vpop.permute.xlu0 %384
        %386 = vrot.lane.b32.xlu0 %v315, 92
        %v387 = vpop.permute.xlu0 %386
        %vm388 = vcmask 752640
        %v389 = vsel %vm388, %v383, %v385
        %v390 = vsel %vm388, %v385, %v387
        %394 = vrot.lane.b32.xlu0 %v320, 91
        %v395 = vpop.permute.xlu0 %394
        %396 = vrot.lane.b32.xlu0 %v314, 91
        %v397 = vpop.permute.xlu0 %396
        %398 = vrot.lane.b32.xlu0 %v321, 91
        %v399 = vpop.permute.xlu0 %398
        %vm400 = vcmask 744448
        %v401 = vsel %vm400, %v395, %v397
        %v402 = vsel %vm400, %v397, %v399
        %406 = vrot.lane.b32.xlu0 %v314, 90
        %v407 = vpop.permute.xlu0 %406
        %408 = vrot.lane.b32.xlu0 %v318, 90
        %v409 = vpop.permute.xlu0 %408
        %410 = vrot.lane.b32.xlu0 %v315, 90
        %v411 = vpop.permute.xlu0 %410
        %vm412 = vcmask 736256
        %v413 = vsel %vm412, %v407, %v409
        %v414 = vsel %vm412, %v409, %v411
        %vm418 = vcmask 1043456
        %v419 = vsel %vm418, %v314, %v329
        %v420 = vsel %vm418, %v318, %v330
        %v421 = vsel %vm418, %v315, %v327
        %v422 = vsel %vm418, %v341, %v353
        %v423 = vsel %vm418, %v342, %v354
        %v424 = vsel %vm418, %v339, %v351
        %v425 = vsel %vm418, %v365, %v377
        %v426 = vsel %vm418, %v366, %v378
        %v427 = vsel %vm418, %v363, %v375
        %v428 = vsel %vm418, %v389, %v401
        %v429 = vsel %vm418, %v390, %v402
        %v430 = vsel %vm418, %v387, %v399
        %v431 = vsel %vm418, %v413, 0.0
        %v432 = vsel %vm418, %v414, 0.0
        %v433 = vsel %vm418, %v411, 0.0
        %v434 = vld [vmem:[%s1] sm:$0xff]
        %v435 = vld [vmem:[%s2] sm:$0xff]
        %437 = vset.pattern.permute.xlu0 0
        %438 = vperm.xlu0 %437, %v435
        %v439 = vpop.permute.xlu0 %438
        %vm441 = vcmask 326656
        %v443 = vsel %vm441, %v434, 0
        %445 = vmatprep.subr.mxu0 %v420
        %446 = vmatpush1.msra.mxu0 %v419
        %447 = vmatprep.subr.mxu0 %v423
        %448 = vmatpush1.msra.mxu0 %v422
        %449 = vmatprep.subr.mxu0 %v426
        %450 = vmatpush1.msra.mxu0 %v425
        %451 = vmatprep.subr.mxu0 %v429
        %452 = vmatpush1.msra.mxu0 %v428
        %453 = vmatprep.subr.mxu0 %v432
        %454 = vmatpush1.msra.mxu0 %v431
        %455 = vmatprep.subr.mxu0 0.0
        %456 = vmatpush1.msra.mxu0 0.0
        %457 = vmatprep.subr.mxu0 0.0
        %458 = vmatpush1.msra.mxu0 0.0
        %459 = vmatprep.subr.mxu0 0.0
        %460 = vmatpush1.msra.mxu0 0.0
        %461 = vmatprep.subr.mxu0 0.0
        %462 = vmatpush1.msra.mxu0 0.0
        %463 = vmatprep.subr.mxu0 0.0
        %464 = vmatpush1.msra.mxu0 0.0
        %465 = vmatprep.subr.mxu0 0.0
        %466 = vmatpush1.msra.mxu0 0.0
        %467 = vmatprep.subr.mxu0 0.0
        %468 = vmatpush1.msra.mxu0 0.0
        %469 = vmatprep.subr.mxu0 0.0
        %470 = vmatpush1.msra.mxu0 0.0
        %471 = vmatprep.subr.mxu0 0.0
        %472 = vmatpush1.msra.mxu0 0.0
        %473 = vmatprep.subr.mxu0 0.0
        %474 = vmatpush1.msra.mxu0 0.0
        %475 = vmatprep.subr.mxu0 0.0
        %476 = vmatpush1.msra.mxu0 0.0
        %477 = vmatprep.subr.mxu0 0.0
        %478 = vmatpush1.msra.mxu0 0.0
        %479 = vmatprep.subr.mxu0 0.0
        %480 = vmatpush1.msra.mxu0 0.0
        %481 = vmatprep.subr.mxu0 0.0
        %482 = vmatpush1.msra.mxu0 0.0
        %483 = vmatprep.subr.mxu0 0.0
        %484 = vmatpush1.msra.mxu0 0.0
        %485 = vmatprep.subr.mxu0 0.0
        %486 = vmatpush1.msra.mxu0 0.0
        %487 = vmatprep.subr.mxu0 0.0
        %488 = vmatpush1.msra.mxu0 0.0
        %489 = vmatprep.subr.mxu0 0.0
        %490 = vmatpush1.msra.mxu0 0.0
        %491 = vmatprep.subr.mxu0 0.0
        %492 = vmatpush1.msra.mxu0 0.0
        %493 = vmatprep.subr.mxu0 0.0
        %494 = vmatpush1.msra.mxu0 0.0
        %495 = vmatprep.subr.mxu0 0.0
        %496 = vmatpush1.msra.mxu0 0.0
        %497 = vmatprep.subr.mxu0 0.0
        %498 = vmatpush1.msra.mxu0 0.0
        %499 = vmatprep.subr.mxu0 0.0
        %500 = vmatpush1.msra.mxu0 0.0
        %501 = vmatprep.subr.mxu0 0.0
        %502 = vmatpush1.msra.mxu0 0.0
        %503 = vmatprep.subr.mxu0 0.0
        %504 = vmatpush1.msra.mxu0 0.0
        %505 = vmatprep.subr.mxu0 0.0
        %506 = vmatpush1.msra.mxu0 0.0
        %507 = vmatprep.subr.mxu0 0.0
        %508 = vmatpush1.msra.mxu0 0.0
        %509 = vmatprep.mubr.f32.mxu0 0.0
        %510 = vmatmul.mubr.f32.gmra.mrb[0].mxu0 %v443
        %v511 = vpop.f32.mrb[0].mxu0
        %v512 = vadd.f32 %v439, %v511
        %v513 = vpop.f32.mrb[0].mxu0
        %v514 = vadd.f32 %v439, %v513
        %515 = vdwg.mxu0
        %516 = vmatprep.subr.mxu0 0.0
        %517 = vmatpush1.msra.mxu0 %v421
        %518 = vmatprep.subr.mxu0 0.0
        %519 = vmatpush1.msra.mxu0 %v424
        %520 = vmatprep.subr.mxu0 0.0
        %521 = vmatpush1.msra.mxu0 %v427
        %522 = vmatprep.subr.mxu0 0.0
        %523 = vmatpush1.msra.mxu0 %v430
        %524 = vmatprep.subr.mxu0 0.0
        %525 = vmatpush1.msra.mxu0 %v433
        %526 = vmatprep.subr.mxu0 0.0
        %527 = vmatpush1.msra.mxu0 0.0
        %528 = vmatprep.subr.mxu0 0.0
        %529 = vmatpush1.msra.mxu0 0.0
        %530 = vmatprep.subr.mxu0 0.0
        %531 = vmatpush1.msra.mxu0 0.0
        %532 = vmatprep.subr.mxu0 0.0
        %533 = vmatpush1.msra.mxu0 0.0
        %534 = vmatprep.subr.mxu0 0.0
        %535 = vmatpush1.msra.mxu0 0.0
        %536 = vmatprep.subr.mxu0 0.0
        %537 = vmatpush1.msra.mxu0 0.0
        %538 = vmatprep.subr.mxu0 0.0
        %539 = vmatpush1.msra.mxu0 0.0
        %540 = vmatprep.subr.mxu0 0.0
        %541 = vmatpush1.msra.mxu0 0.0
        %542 = vmatprep.subr.mxu0 0.0
        %543 = vmatpush1.msra.mxu0 0.0
        %544 = vmatprep.subr.mxu0 0.0
        %545 = vmatpush1.msra.mxu0 0.0
        %546 = vmatprep.subr.mxu0 0.0
        %547 = vmatpush1.msra.mxu0 0.0
        %548 = vmatprep.subr.mxu0 0.0
        %549 = vmatpush1.msra.mxu0 0.0
        %550 = vmatprep.subr.mxu0 0.0
        %551 = vmatpush1.msra.mxu0 0.0
        %552 = vmatprep.subr.mxu0 0.0
        %553 = vmatpush1.msra.mxu0 0.0
        %554 = vmatprep.subr.mxu0 0.0
        %555 = vmatpush1.msra.mxu0 0.0
        %556 = vmatprep.subr.mxu0 0.0
        %557 = vmatpush1.msra.mxu0 0.0
        %558 = vmatprep.subr.mxu0 0.0
        %559 = vmatpush1.msra.mxu0 0.0
        %560 = vmatprep.subr.mxu0 0.0
        %561 = vmatpush1.msra.mxu0 0.0
        %562 = vmatprep.subr.mxu0 0.0
        %563 = vmatpush1.msra.mxu0 0.0
        %564 = vmatprep.subr.mxu0 0.0
        %565 = vmatpush1.msra.mxu0 0.0
        %566 = vmatprep.subr.mxu0 0.0
        %567 = vmatpush1.msra.mxu0 0.0
        %568 = vmatprep.subr.mxu0 0.0
        %569 = vmatpush1.msra.mxu0 0.0
        %570 = vmatprep.subr.mxu0 0.0
        %571 = vmatpush1.msra.mxu0 0.0
        %572 = vmatprep.subr.mxu0 0.0
        %573 = vmatpush1.msra.mxu0 0.0
        %574 = vmatprep.subr.mxu0 0.0
        %575 = vmatpush1.msra.mxu0 0.0
        %576 = vmatprep.subr.mxu0 0.0
        %577 = vmatpush1.msra.mxu0 0.0
        %578 = vmatprep.subr.mxu0 0.0
        %579 = vmatpush1.msra.mxu0 0.0
        %580 = vmatprep.mubr.f32.mxu0 0.0
        %581 = vmatmul.mubr.f32.gmra.mrb[0].mxu0 %v443
        %v582 = vpop.f32.mrb[0].mxu0
        %v583 = vadd.f32 %v439, %v582
        %v584 = vpop.f32.mrb[0].mxu0
        %585 = vdwg.mxu0
        %vm586 = vcmask 130048
        %587 = vst.msk [vmem:[%s200] sm:$0xff] %vm586, %v512
        %589 = vrot.lane.b32.xlu0 %v512, 126
        %v590 = vpop.permute.xlu0 %589
        %vm592 = vcmask 261248
        %593 = vst.msk [vmem:[%s200] sm:$0xff] %vm592, %v590
        %594 = vrot.lane.b32.xlu0 %v512, 124
        %v595 = vpop.permute.xlu0 %594
        %vm597 = vcmask 392448
        %598 = vst.msk [vmem:[%s200] sm:$0xff] %vm597, %v595
        %599 = vrot.lane.b32.xlu0 %v512, 122
        %v600 = vpop.permute.xlu0 %599
        %vm602 = vcmask 523648
        %603 = vst.msk [vmem:[%s200] sm:$0xff] %vm602, %v600
        %604 = vrot.lane.b32.xlu0 %v512, 120
        %v605 = vpop.permute.xlu0 %604
        %vm607 = vcmask 654848
        %608 = vst.msk [vmem:[%s200] sm:$0xff] %vm607, %v605
        %609 = vrot.lane.b32.xlu0 %v512, 118
        %v610 = vpop.permute.xlu0 %609
        %vm612 = vcmask 786048
        %613 = vst.msk [vmem:[%s200] sm:$0xff] %vm612, %v610
        %614 = vrot.lane.b32.xlu0 %v512, 116
        %v615 = vpop.permute.xlu0 %614
        %vm617 = vcmask 917248
        %618 = vst.msk [vmem:[%s200] sm:$0xff] %vm617, %v615
        %620 = vrot.lane.b32.xlu0 %v512, 114
        %v621 = vpop.permute.xlu0 %620
        %622 = vrot.lane.b32.xlu0 %v514, 114
        %v623 = vpop.permute.xlu0 %622
        %vm624 = vcmask 932864
        %v625 = vsel %vm624, %v621, %v623
        %vm627 = vcmask 1048448
        %628 = vst.msk [vmem:[%s200] sm:$0xff] %vm627, %v625
        %629 = vrot.lane.b32.xlu0 %v514, 112
        %v630 = vpop.permute.xlu0 %629
        %632 = vst.msk [vmem:[%s200 + $0x8] sm:$0xff] %vm586, %v630
        %633 = vrot.lane.b32.xlu0 %v514, 110
        %v634 = vpop.permute.xlu0 %633
        %636 = vst.msk [vmem:[%s200 + $0x8] sm:$0xff] %vm592, %v634
        %637 = vrot.lane.b32.xlu0 %v514, 108
        %v638 = vpop.permute.xlu0 %637
        %640 = vst.msk [vmem:[%s200 + $0x8] sm:$0xff] %vm597, %v638
        %641 = vrot.lane.b32.xlu0 %v514, 106
        %v642 = vpop.permute.xlu0 %641
        %644 = vst.msk [vmem:[%s200 + $0x8] sm:$0xff] %vm602, %v642
        %645 = vrot.lane.b32.xlu0 %v514, 104
        %v646 = vpop.permute.xlu0 %645
        %648 = vst.msk [vmem:[%s200 + $0x8] sm:$0xff] %vm607, %v646
        %649 = vrot.lane.b32.xlu0 %v514, 102
        %v650 = vpop.permute.xlu0 %649
        %652 = vst.msk [vmem:[%s200 + $0x8] sm:$0xff] %vm612, %v650
        %654 = vrot.lane.b32.xlu0 %v514, 100
        %v655 = vpop.permute.xlu0 %654
        %656 = vrot.lane.b32.xlu0 %v583, 100
        %v657 = vpop.permute.xlu0 %656
        %vm658 = vcmask 818176
        %v659 = vsel %vm658, %v655, %v657
        %661 = vst.msk [vmem:[%s200 + $0x8] sm:$0xff] %vm617, %v659
        %662 = vrot.lane.b32.xlu0 %v583, 98
        %v663 = vpop.permute.xlu0 %662
        %665 = vst.msk [vmem:[%s200 + $0x8] sm:$0xff] %vm627, %v663
        %s666 = sand.u32 %s110, 1
        %s667 = scalar_lea.sflag [#allocation5], %s666
        %s668 = sand.u32 %s110, 1
        %s669 = smul.addr %s668, 16
        %s670 = scalar_lea.vmem [#allocation6], %s669
        // Predicated region
        $region37: #{tpu_custom_call.1} parent=31 // pred_check
          %p671 = pneg %p120
        $region38: #{tpu_custom_call.1} parent=31 // pred_check_branch
          %673 = sbr.rel (%p671) target = $region40
        $region39: #{tpu_custom_call.1} parent=31 // pred_region
          %s674 = smul.u32 2, %s25
          %s676 = ssub.s32 256, 256
          %677 = vsyncadd %s667, %s676
          %s678 = smul.addr %s24, 2
          %s679 = sadd.s32 %s674, %s678
          %s680 = smul.addr %s679, 128
          %s681 = scalar_lea.hbm %s3, %s680
          %s683 = sshll.u32 %s670, 4
          %s684 = int_to_ptr.vmem [resolvable:$true] %s683
          %686 = dma.vmem_to_hbm [thread:$0]  %s684, 256, %s681, %s667
        $region40: #{tpu_custom_call.1} parent=31 // pred_fallthru
          _
      $region32: #{tpu_custom_call.1} parent=5 // pred_fallthru
        _
      %p687 = scmp.le.s32.totalorder 2, %s15
      // Predicated region
      $region41: #{tpu_custom_call.1} parent=5 // pred_check
        %p688 = pneg %p687
      $region42: #{tpu_custom_call.1} parent=5 // pred_check_branch
        %690 = sbr.rel (%p688) target = $region44
      $region43: #{tpu_custom_call.1} parent=5 // pred_region
        %s691 = ssub.s32 %s15, 2
        // Predicated region
        $region45: #{tpu_custom_call.1} parent=43 // pred_check
          %p692 = pneg %p126
        $region46: #{tpu_custom_call.1} parent=43 // pred_check_branch
          %694 = sbr.rel (%p692) target = $region48
        $region47: #{tpu_custom_call.1} parent=43 // pred_region
          %s695 = sand.u32 %s111, 1
          %s696 = scalar_lea.sflag [#allocation5], %s695
          %s697 = sand.u32 %s111, 1
          %s698 = smul.addr %s697, 16
          %s699 = scalar_lea.vmem [#allocation6], %s698
          %700 = dma.done %s696, 256
        $region48: #{tpu_custom_call.1} parent=43 // pred_fallthru
          _
      $region44: #{tpu_custom_call.1} parent=5 // pred_fallthru
        _
    $region6: #{tpu_custom_call.1} parent=1 // loop_footer
      %s19 = sadd.s32 1, %s15
    $region7: #{tpu_custom_call.1} parent=1 // loop_footer_branch
      %14 = sbr.rel target = $region3
    $region8: #{tpu_custom_call.1} parent=1 // loop_exit
      _
    %701 = vsyncpa [#allocation4], 1
    %s702 = scalar_lea.sflag [#allocation4], 1
    %703 = vsyncpa %s702, 1
    %704 = vsyncpa [#allocation5], 1
    %s705 = scalar_lea.sflag [#allocation5], 1
    %706 = vsyncpa %s705, 1

</llo_original>
